<compile_context>
chip_gen: v6e
topology: v6e:2x2x1
jax: 0.10.0
libtpu: 0.0.40
codegen_flags: <defaults>
</compile_context>

<pallas_src>
import numpy as np
import jax
import jax.numpy as jnp
from jax import lax
from jax.experimental import pallas as pl
from jax.experimental.pallas import tpu as pltpu


# ----------------- deterministic parameter construction (mirrors __init__) -----------------
def get_gaussian_kernel(k=3, mu=0, sigma=1, normalize=True):
    gaussian_1D = np.linspace(-1, 1, k)
    x, y = np.meshgrid(gaussian_1D, gaussian_1D)
    distance = (x ** 2 + y ** 2) ** 0.5
    gaussian_2D = np.exp(-(distance - mu) ** 2 / (2 * sigma ** 2))
    gaussian_2D = gaussian_2D / (2 * np.pi * sigma ** 2)
    if normalize:
        gaussian_2D = gaussian_2D / np.sum(gaussian_2D)
    return gaussian_2D


def get_sobel_kernel(k=3):
    rng = np.linspace(-(k // 2), k // 2, k)
    x, y = np.meshgrid(rng, rng)
    num = x
    den = x ** 2 + y ** 2
    den[:, k // 2] = 1
    return num / den


def get_thin_kernels(start=0, end=360, step=45):
    # NumPy reimplementation of cv2.getRotationMatrix2D + warpAffine(INTER_NEAREST):
    # warpAffine samples src at the inverse rotation of the dst offset about the center.
    # Produces the same 8 kernels (entries in {-1, 0, 1}) as the reference.
    k_inc = 5
    thin0 = np.zeros((k_inc, k_inc))
    thin0[k_inc // 2, k_inc // 2] = 1
    thin0[k_inc // 2, k_inc // 2 + 1:] = -1
    kernels = []
    for angle in range(start, end, step):
        rad = np.deg2rad(angle)
        ca, sa = np.cos(rad), np.sin(rad)
        rotated = np.zeros_like(thin0)
        for yy in range(k_inc):
            for xx in range(k_inc):
                dx, dy = xx - 2, yy - 2
                sx = ca * dx - sa * dy + 2.0   # inverse rotation (what warpAffine does)
                sy = sa * dx + ca * dy + 2.0
                isx, isy = int(np.rint(sx)), int(np.rint(sy))
                if 0 <= isx < k_inc and 0 <= isy < k_inc:
                    rotated[yy, xx] = thin0[isy, isx]
        ka = rotated[1:-1, 1:-1]
        ka = ka * (np.abs(ka) == 1)
        kernels.append(ka)
    return kernels


GAUSS_K   = get_gaussian_kernel(3, 0, 1)
SOBEL_X_K = get_sobel_kernel(3)
DIR_K     = get_thin_kernels()                       # 8 x (3, 3), entries in {-1, 0, 1}
TAN_22_5  = float(np.tan(np.pi / 8.0))               # orientation sector boundary

# Separable factors (exact in real arithmetic; verified at import time).
_g1 = np.exp(-np.linspace(-1.0, 1.0, 3) ** 2 / 2.0)
_g1 = _g1 / _g1.sum()
G_EDGE, G_MID = float(_g1[0]), float(_g1[1])
assert np.allclose(np.outer(_g1, _g1), GAUSS_K)
assert np.allclose(np.outer([0.5, 1.0, 0.5], [-1.0, 0.0, 1.0]), SOBEL_X_K)

# Each directional kernel is +1 at the center and -1 at exactly one neighbor, so
# its conv is mag[i, j] - mag[i + dy, j + dx].  Extract (dy, dx) per direction.
DIR_OFF = []
for _k in DIR_K:
    assert _k[1, 1] == 1.0
    _neg = np.argwhere(_k == -1.0)
    assert _neg.shape == (1, 2)
    DIR_OFF.append((int(_neg[0, 0]) - 1, int(_neg[0, 1]) - 1))

# TODO(synk): hysteresis 3x3 conv weights (np.ones((3,3))+0.25) unused on the default path.


# ----------------- Pallas kernel: full Canny pipeline for one (1, C, H, W) image -----------------
def _canny_kernel(img_ref, out_ref):
    # img_ref block: (1, C, H, W) ; out_ref block: (1, 1, H, W)
    _, C, H, W = img_ref.shape

    # Boundary-validity masks, built once and shared by every shift (hoisted iota).
    row = lax.broadcasted_iota(jnp.int32, (H, W), 0)
    col = lax.broadcasted_iota(jnp.int32, (H, W), 1)
    row_ok = {-1: row >= 1, 1: row < (H - 1)}
    col_ok = {-1: col >= 1, 1: col < (W - 1)}
    mask_cache = {}

    def edge_mask(dy, dx):
        key = (dy, dx)
        if key not in mask_cache:
            m = None
            if dy != 0:
                m = row_ok[dy]
            if dx != 0:
                m = col_ok[dx] if m is None else (m & col_ok[dx])
            mask_cache[key] = m
        return mask_cache[key]

    def shift(x, dy, dx):
        """out[i, j] = x[i+dy, j+dx], zero outside the image (PyTorch zero padding)."""
        # TODO(synk): for pure-vertical shifts a single boundary-row zeroing would be
        # cheaper than this full-plane select on the binding VALU slot.
        if dy == 0 and dx == 0:
            return x
        y = x
        if dy != 0:
            y = pltpu.roll(y, shift=(-dy) % H, axis=0)
        if dx != 0:
            y = pltpu.roll(y, shift=(-dx) % W, axis=1)
        return jnp.where(edge_mask(dy, dx), y, 0.0)

    # Channel mean and the reference's final `* 255` folded into one scale
    # (all later ops -- sqrt, abs, tan-sector compares, mag>neighbor compares,
    # keep/zero select -- are scale-invariant, so the output is unchanged).
    scale = np.float32(255.0 / C)

    # ---- channel mean first (conv is linear, so this equals per-channel sum / C) ----
    s = img_ref[0, 0, :, :]
    for c in range(1, C):
        s = s + img_ref[0, c, :, :]
    s = s * scale

    # ---- Gaussian blur, separable [g0 g1 g0] (vertical) x [g0 g1 g0] (horizontal) ----
    tv = G_EDGE * shift(s, -1, 0) + G_MID * s + G_EDGE * shift(s, 1, 0)
    blurred = G_EDGE * shift(tv, 0, -1) + G_MID * tv + G_EDGE * shift(tv, 0, 1)

    # ---- Sobel, separable: sobel_x = [0.5 1 0.5]_v (x) [-1 0 1]_h, sobel_y = transpose ----
    # TODO(synk): on v6e/v7x the horizontal 1-D passes could be offloaded to the idle MXU
    # as a banded WxW right-multiply, and the post-mean math could run in bf16.
    sm_v = 0.5 * shift(blurred, -1, 0) + blurred + 0.5 * shift(blurred, 1, 0)
    gx = shift(sm_v, 0, 1) - shift(sm_v, 0, -1)
    sm_h = 0.5 * shift(blurred, 0, -1) + blurred + 0.5 * shift(blurred, 0, 1)
    gy = shift(sm_h, 1, 0) - shift(sm_h, -1, 0)

    mag = jnp.sqrt(gx * gx + gy * gy)

    # ---- orientation sector predicates (replaces atan2 + int32 idx plane).
    # idx == round((atan2(gy,gx)*180/pi + 180)/45) % 8, resolved via comparisons
    # against tan(22.5 deg); differs from the reference only for gradients lying
    # exactly (to fp precision) on a 22.5-degree sector boundary.
    ax = jnp.abs(gx)
    ay = jnp.abs(gy)
    horiz = ay <= TAN_22_5 * ax                           # idx in {0, 4}
    not_h = jnp.logical_not(horiz)
    vert = not_h & (ax <= TAN_22_5 * ay)                  # idx in {2, 6}
    diag = not_h & (ax > TAN_22_5 * ay)                   # idx in {1, 3, 5, 7}
    same_sign = (gx > 0) == (gy > 0)
    oriented = (horiz,                                    # pair (0, 4)
                diag & same_sign,                         # pair (1, 5)
                vert,                                     # pair (2, 6)
                diag & jnp.logical_not(same_sign))        # pair (3, 7)

    # ---- non-maximum suppression, single keep predicate.
    # Directional conv k == mag - neighbor_k, so min(dir_pos, dir_neg) > 0
    # <=> (mag > neighbor_pos) & (mag > neighbor_neg)  (bit-exact for finite f32).
    # Shifted neighbor planes are built lazily, two per sector pair, and consumed
    # immediately to keep the number of simultaneously-live full planes low.
    keep = None
    for pos_i in range(4):
        dy_p, dx_p = DIR_OFF[pos_i]
        dy_n, dx_n = DIR_OFF[pos_i + 4]
        is_max = (mag > shift(mag, dy_p, dx_p)) & (mag > shift(mag, dy_n, dx_n))
        term = oriented[pos_i] & is_max
        keep = term if keep is None else (keep | term)

    out_ref[0, 0, :, :] = jnp.where(keep, mag, 0.0)


# ----------------- wrapper -----------------
def _vmem_limit(C, H, W):
    """Explicit VMEM request, capped by the actual chip's per-core VMEM capacity."""
    plane = H * W * 4
    try:
        phys = int(pltpu.get_tpu_info().vmem_capacity_bytes)
    except Exception:
        phys = 64 << 20                       # conservative (v7x); v5e/v6e have 128 MiB
    usable = max(16 << 20, phys - (16 << 20))  # leave headroom for Mosaic internals
    io = 2 * (C + 1) * plane                   # double-buffered input + output block
    intermediates = 16 * plane                 # live f32/bool full-plane temporaries
    need = io + intermediates + (4 << 20)
    return int(min(usable, max(32 << 20, need)))


def canny_filter(img, low_threshold=None, high_threshold=None, hysteresis=True):
    """img: (B, C, H, W) float32, NCHW. Returns (B, 1, H, W) float32 == thin_edges * 255."""
    if low_threshold is not None or high_threshold is not None:
        # TODO(synk): optional low/high-threshold + hysteresis branch of forward() not
        # implemented (default call uses low_threshold=None, bypassing it).
        raise NotImplementedError("threshold/hysteresis branch not implemented")
    img = jnp.asarray(img, jnp.float32)
    B, C, H, W = img.shape
    vmem_limit = _vmem_limit(C, H, W)
    # One image per grid step: grid never collapses to a single step (v7x's second
    # TensorCore gets work via the "parallel" axis, and step i+1's DMA hides under
    # step i's compute on every generation).
    # TODO(synk): H-tiling with a 3-row halo (Gaussian r=1 + Sobel r=1 + NMS r=1) for
    # single images whose (C+1) planes exceed per-core VMEM (e.g. >=1080p x C=3 on
    # v7x's 64 MiB) is not implemented; each grid step processes one whole image.
    return pl.pallas_call(
        _canny_kernel,
        out_shape=jax.ShapeDtypeStruct((B, 1, H, W), jnp.float32),
        grid=(B,),
        in_specs=[pl.BlockSpec((1, C, H, W), lambda i: (i, 0, 0, 0))],
        out_specs=pl.BlockSpec((1, 1, H, W), lambda i: (i, 0, 0, 0)),
        compiler_params=pltpu.CompilerParams(
            dimension_semantics=("parallel",),
            vmem_limit_bytes=vmem_limit),
    )(img)


if __name__ == "__main__":
    key = jax.random.PRNGKey(0)
    img = jax.random.normal(key, (2, 4, 16, 16), dtype=jnp.float32)
    out = canny_filter(img)
    out = jax.block_until_ready(out)
    assert out.shape == (2, 1, 16, 16), out.shape
    assert out.dtype == jnp.float32, out.dtype
    assert bool(jnp.all(jnp.isfinite(out)))
    print("KERNEL_OK")
</pallas_src>

<mosaic_0001>
module attributes {stable_mosaic.version = 11 : i64} {
  func.func @_canny_kernel(%arg0: i32, %arg1: memref<1x4x16x16xf32, #tpu.memory_space<vmem>>, %arg2: memref<1x1x16x16xf32, #tpu.memory_space<vmem>>) attributes {dimension_semantics = [#tpu.dimension_semantics<parallel>], iteration_bounds = array<i64: 2>, scalar_prefetch = 0 : i64, scratch_operands = 0 : i64, tpu.core_type = #tpu.core_type<tc>, window_params = [{transform_indices = @transform_0, window_bounds = array<i64: 1, 4, 16, 16>}, {transform_indices = @transform_1, window_bounds = array<i64: 1, 1, 16, 16>}]} {
    %0 = tpu.iota {dimensions = array<i32: 0>} : vector<16x16xi32>
    %1 = tpu.iota {dimensions = array<i32: 1>} : vector<16x16xi32>
    %c1_i32 = arith.constant 1 : i32
    %2 = vector.broadcast %c1_i32 : i32 to vector<16x16xi32>
    %3 = arith.cmpi sge, %0, %2 : vector<16x16xi32>
    %c15_i32 = arith.constant 15 : i32
    %4 = vector.broadcast %c15_i32 : i32 to vector<16x16xi32>
    %5 = arith.cmpi slt, %0, %4 : vector<16x16xi32>
    %c1_i32_0 = arith.constant 1 : i32
    %6 = vector.broadcast %c1_i32_0 : i32 to vector<16x16xi32>
    %7 = arith.cmpi sge, %1, %6 : vector<16x16xi32>
    %c15_i32_1 = arith.constant 15 : i32
    %8 = vector.broadcast %c15_i32_1 : i32 to vector<16x16xi32>
    %9 = arith.cmpi slt, %1, %8 : vector<16x16xi32>
    %c0 = arith.constant 0 : index
    %c0_2 = arith.constant 0 : index
    %c0_3 = arith.constant 0 : index
    %c0_4 = arith.constant 0 : index
    %10 = vector.load %arg1[%c0, %c0_2, %c0_3, %c0_4] : memref<1x4x16x16xf32, #tpu.memory_space<vmem>>, vector<1x1x16x16xf32>
    %11 = vector.shape_cast %10 : vector<1x1x16x16xf32> to vector<16x16xf32>
    %c0_5 = arith.constant 0 : index
    %c1 = arith.constant 1 : index
    %c0_6 = arith.constant 0 : index
    %c0_7 = arith.constant 0 : index
    %12 = vector.load %arg1[%c0_5, %c1, %c0_6, %c0_7] : memref<1x4x16x16xf32, #tpu.memory_space<vmem>>, vector<1x1x16x16xf32>
    %13 = vector.shape_cast %12 : vector<1x1x16x16xf32> to vector<16x16xf32>
    %14 = arith.addf %11, %13 : vector<16x16xf32>
    %c0_8 = arith.constant 0 : index
    %c2 = arith.constant 2 : index
    %c0_9 = arith.constant 0 : index
    %c0_10 = arith.constant 0 : index
    %15 = vector.load %arg1[%c0_8, %c2, %c0_9, %c0_10] : memref<1x4x16x16xf32, #tpu.memory_space<vmem>>, vector<1x1x16x16xf32>
    %16 = vector.shape_cast %15 : vector<1x1x16x16xf32> to vector<16x16xf32>
    %17 = arith.addf %14, %16 : vector<16x16xf32>
    %c0_11 = arith.constant 0 : index
    %c3 = arith.constant 3 : index
    %c0_12 = arith.constant 0 : index
    %c0_13 = arith.constant 0 : index
    %18 = vector.load %arg1[%c0_11, %c3, %c0_12, %c0_13] : memref<1x4x16x16xf32, #tpu.memory_space<vmem>>, vector<1x1x16x16xf32>
    %19 = vector.shape_cast %18 : vector<1x1x16x16xf32> to vector<16x16xf32>
    %20 = arith.addf %17, %19 : vector<16x16xf32>
    %cst = arith.constant 6.375000e+01 : f32
    %21 = vector.broadcast %cst : f32 to vector<16x16xf32>
    %22 = arith.mulf %20, %21 : vector<16x16xf32>
    %c1_i32_14 = arith.constant 1 : i32
    %23 = tpu.dynamic_rotate %22 by %c1_i32_14 dim 0 : vector<16x16xf32>, i32 -> vector<16x16xf32>
    %cst_15 = arith.constant 0.000000e+00 : f32
    %24 = vector.broadcast %cst_15 : f32 to vector<16x16xf32>
    %25 = arith.select %3, %23, %24 : vector<16x16xi1>, vector<16x16xf32>
    %cst_16 = arith.constant 0.274068624 : f32
    %26 = vector.broadcast %cst_16 : f32 to vector<16x16xf32>
    %27 = arith.mulf %26, %25 : vector<16x16xf32>
    %cst_17 = arith.constant 0.451862752 : f32
    %28 = vector.broadcast %cst_17 : f32 to vector<16x16xf32>
    %29 = arith.mulf %28, %22 : vector<16x16xf32>
    %30 = arith.addf %27, %29 : vector<16x16xf32>
    %c15_i32_18 = arith.constant 15 : i32
    %31 = tpu.dynamic_rotate %22 by %c15_i32_18 dim 0 : vector<16x16xf32>, i32 -> vector<16x16xf32>
    %cst_19 = arith.constant 0.000000e+00 : f32
    %32 = vector.broadcast %cst_19 : f32 to vector<16x16xf32>
    %33 = arith.select %5, %31, %32 : vector<16x16xi1>, vector<16x16xf32>
    %cst_20 = arith.constant 0.274068624 : f32
    %34 = vector.broadcast %cst_20 : f32 to vector<16x16xf32>
    %35 = arith.mulf %34, %33 : vector<16x16xf32>
    %36 = arith.addf %30, %35 : vector<16x16xf32>
    %c1_i32_21 = arith.constant 1 : i32
    %37 = tpu.dynamic_rotate %36 by %c1_i32_21 dim 1 : vector<16x16xf32>, i32 -> vector<16x16xf32>
    %cst_22 = arith.constant 0.000000e+00 : f32
    %38 = vector.broadcast %cst_22 : f32 to vector<16x16xf32>
    %39 = arith.select %7, %37, %38 : vector<16x16xi1>, vector<16x16xf32>
    %cst_23 = arith.constant 0.274068624 : f32
    %40 = vector.broadcast %cst_23 : f32 to vector<16x16xf32>
    %41 = arith.mulf %40, %39 : vector<16x16xf32>
    %cst_24 = arith.constant 0.451862752 : f32
    %42 = vector.broadcast %cst_24 : f32 to vector<16x16xf32>
    %43 = arith.mulf %42, %36 : vector<16x16xf32>
    %44 = arith.addf %41, %43 : vector<16x16xf32>
    %c15_i32_25 = arith.constant 15 : i32
    %45 = tpu.dynamic_rotate %36 by %c15_i32_25 dim 1 : vector<16x16xf32>, i32 -> vector<16x16xf32>
    %cst_26 = arith.constant 0.000000e+00 : f32
    %46 = vector.broadcast %cst_26 : f32 to vector<16x16xf32>
    %47 = arith.select %9, %45, %46 : vector<16x16xi1>, vector<16x16xf32>
    %cst_27 = arith.constant 0.274068624 : f32
    %48 = vector.broadcast %cst_27 : f32 to vector<16x16xf32>
    %49 = arith.mulf %48, %47 : vector<16x16xf32>
    %50 = arith.addf %44, %49 : vector<16x16xf32>
    %c1_i32_28 = arith.constant 1 : i32
    %51 = tpu.dynamic_rotate %50 by %c1_i32_28 dim 0 : vector<16x16xf32>, i32 -> vector<16x16xf32>
    %cst_29 = arith.constant 0.000000e+00 : f32
    %52 = vector.broadcast %cst_29 : f32 to vector<16x16xf32>
    %53 = arith.select %3, %51, %52 : vector<16x16xi1>, vector<16x16xf32>
    %cst_30 = arith.constant 5.000000e-01 : f32
    %54 = vector.broadcast %cst_30 : f32 to vector<16x16xf32>
    %55 = arith.mulf %54, %53 : vector<16x16xf32>
    %56 = arith.addf %55, %50 : vector<16x16xf32>
    %c15_i32_31 = arith.constant 15 : i32
    %57 = tpu.dynamic_rotate %50 by %c15_i32_31 dim 0 : vector<16x16xf32>, i32 -> vector<16x16xf32>
    %cst_32 = arith.constant 0.000000e+00 : f32
    %58 = vector.broadcast %cst_32 : f32 to vector<16x16xf32>
    %59 = arith.select %5, %57, %58 : vector<16x16xi1>, vector<16x16xf32>
    %cst_33 = arith.constant 5.000000e-01 : f32
    %60 = vector.broadcast %cst_33 : f32 to vector<16x16xf32>
    %61 = arith.mulf %60, %59 : vector<16x16xf32>
    %62 = arith.addf %56, %61 : vector<16x16xf32>
    %c15_i32_34 = arith.constant 15 : i32
    %63 = tpu.dynamic_rotate %62 by %c15_i32_34 dim 1 : vector<16x16xf32>, i32 -> vector<16x16xf32>
    %cst_35 = arith.constant 0.000000e+00 : f32
    %64 = vector.broadcast %cst_35 : f32 to vector<16x16xf32>
    %65 = arith.select %9, %63, %64 : vector<16x16xi1>, vector<16x16xf32>
    %c1_i32_36 = arith.constant 1 : i32
    %66 = tpu.dynamic_rotate %62 by %c1_i32_36 dim 1 : vector<16x16xf32>, i32 -> vector<16x16xf32>
    %cst_37 = arith.constant 0.000000e+00 : f32
    %67 = vector.broadcast %cst_37 : f32 to vector<16x16xf32>
    %68 = arith.select %7, %66, %67 : vector<16x16xi1>, vector<16x16xf32>
    %69 = arith.subf %65, %68 : vector<16x16xf32>
    %c1_i32_38 = arith.constant 1 : i32
    %70 = tpu.dynamic_rotate %50 by %c1_i32_38 dim 1 : vector<16x16xf32>, i32 -> vector<16x16xf32>
    %cst_39 = arith.constant 0.000000e+00 : f32
    %71 = vector.broadcast %cst_39 : f32 to vector<16x16xf32>
    %72 = arith.select %7, %70, %71 : vector<16x16xi1>, vector<16x16xf32>
    %cst_40 = arith.constant 5.000000e-01 : f32
    %73 = vector.broadcast %cst_40 : f32 to vector<16x16xf32>
    %74 = arith.mulf %73, %72 : vector<16x16xf32>
    %75 = arith.addf %74, %50 : vector<16x16xf32>
    %c15_i32_41 = arith.constant 15 : i32
    %76 = tpu.dynamic_rotate %50 by %c15_i32_41 dim 1 : vector<16x16xf32>, i32 -> vector<16x16xf32>
    %cst_42 = arith.constant 0.000000e+00 : f32
    %77 = vector.broadcast %cst_42 : f32 to vector<16x16xf32>
    %78 = arith.select %9, %76, %77 : vector<16x16xi1>, vector<16x16xf32>
    %cst_43 = arith.constant 5.000000e-01 : f32
    %79 = vector.broadcast %cst_43 : f32 to vector<16x16xf32>
    %80 = arith.mulf %79, %78 : vector<16x16xf32>
    %81 = arith.addf %75, %80 : vector<16x16xf32>
    %c15_i32_44 = arith.constant 15 : i32
    %82 = tpu.dynamic_rotate %81 by %c15_i32_44 dim 0 : vector<16x16xf32>, i32 -> vector<16x16xf32>
    %cst_45 = arith.constant 0.000000e+00 : f32
    %83 = vector.broadcast %cst_45 : f32 to vector<16x16xf32>
    %84 = arith.select %5, %82, %83 : vector<16x16xi1>, vector<16x16xf32>
    %c1_i32_46 = arith.constant 1 : i32
    %85 = tpu.dynamic_rotate %81 by %c1_i32_46 dim 0 : vector<16x16xf32>, i32 -> vector<16x16xf32>
    %cst_47 = arith.constant 0.000000e+00 : f32
    %86 = vector.broadcast %cst_47 : f32 to vector<16x16xf32>
    %87 = arith.select %3, %85, %86 : vector<16x16xi1>, vector<16x16xf32>
    %88 = arith.subf %84, %87 : vector<16x16xf32>
    %89 = arith.mulf %69, %69 : vector<16x16xf32>
    %90 = arith.mulf %88, %88 : vector<16x16xf32>
    %91 = arith.addf %89, %90 : vector<16x16xf32>
    %92 = math.sqrt %91 : vector<16x16xf32>
    %93 = math.absf %69 : vector<16x16xf32>
    %94 = math.absf %88 : vector<16x16xf32>
    %cst_48 = arith.constant 0.414213568 : f32
    %95 = vector.broadcast %cst_48 : f32 to vector<16x16xf32>
    %96 = arith.mulf %95, %93 : vector<16x16xf32>
    %97 = arith.cmpf ole, %94, %96 : vector<16x16xf32>
    %cst_49 = arith.constant dense<true> : vector<16x16xi1>
    %98 = arith.xori %97, %cst_49 : vector<16x16xi1>
    %cst_50 = arith.constant 0.414213568 : f32
    %99 = vector.broadcast %cst_50 : f32 to vector<16x16xf32>
    %100 = arith.mulf %99, %94 : vector<16x16xf32>
    %101 = arith.cmpf ole, %93, %100 : vector<16x16xf32>
    %102 = arith.andi %98, %101 : vector<16x16xi1>
    %cst_51 = arith.constant 0.414213568 : f32
    %103 = vector.broadcast %cst_51 : f32 to vector<16x16xf32>
    %104 = arith.mulf %103, %94 : vector<16x16xf32>
    %105 = arith.cmpf ogt, %93, %104 : vector<16x16xf32>
    %106 = arith.andi %98, %105 : vector<16x16xi1>
    %cst_52 = arith.constant 0.000000e+00 : f32
    %107 = vector.broadcast %cst_52 : f32 to vector<16x16xf32>
    %108 = arith.cmpf ogt, %69, %107 : vector<16x16xf32>
    %cst_53 = arith.constant 0.000000e+00 : f32
    %109 = vector.broadcast %cst_53 : f32 to vector<16x16xf32>
    %110 = arith.cmpf ogt, %88, %109 : vector<16x16xf32>
    %111 = arith.xori %108, %110 : vector<16x16xi1>
    %cst_54 = arith.constant dense<true> : vector<16x16xi1>
    %112 = arith.xori %111, %cst_54 : vector<16x16xi1>
    %113 = arith.andi %106, %112 : vector<16x16xi1>
    %cst_55 = arith.constant dense<true> : vector<16x16xi1>
    %114 = arith.xori %112, %cst_55 : vector<16x16xi1>
    %115 = arith.andi %106, %114 : vector<16x16xi1>
    %c15_i32_56 = arith.constant 15 : i32
    %116 = tpu.dynamic_rotate %92 by %c15_i32_56 dim 1 : vector<16x16xf32>, i32 -> vector<16x16xf32>
    %cst_57 = arith.constant 0.000000e+00 : f32
    %117 = vector.broadcast %cst_57 : f32 to vector<16x16xf32>
    %118 = arith.select %9, %116, %117 : vector<16x16xi1>, vector<16x16xf32>
    %119 = arith.cmpf ogt, %92, %118 : vector<16x16xf32>
    %c1_i32_58 = arith.constant 1 : i32
    %120 = tpu.dynamic_rotate %92 by %c1_i32_58 dim 1 : vector<16x16xf32>, i32 -> vector<16x16xf32>
    %cst_59 = arith.constant 0.000000e+00 : f32
    %121 = vector.broadcast %cst_59 : f32 to vector<16x16xf32>
    %122 = arith.select %7, %120, %121 : vector<16x16xi1>, vector<16x16xf32>
    %123 = arith.cmpf ogt, %92, %122 : vector<16x16xf32>
    %124 = arith.andi %119, %123 : vector<16x16xi1>
    %125 = arith.andi %97, %124 : vector<16x16xi1>
    %c1_i32_60 = arith.constant 1 : i32
    %126 = tpu.dynamic_rotate %92 by %c1_i32_60 dim 0 : vector<16x16xf32>, i32 -> vector<16x16xf32>
    %c15_i32_61 = arith.constant 15 : i32
    %127 = tpu.dynamic_rotate %126 by %c15_i32_61 dim 1 : vector<16x16xf32>, i32 -> vector<16x16xf32>
    %128 = arith.andi %3, %9 : vector<16x16xi1>
    %cst_62 = arith.constant 0.000000e+00 : f32
    %129 = vector.broadcast %cst_62 : f32 to vector<16x16xf32>
    %130 = arith.select %128, %127, %129 : vector<16x16xi1>, vector<16x16xf32>
    %131 = arith.cmpf ogt, %92, %130 : vector<16x16xf32>
    %c15_i32_63 = arith.constant 15 : i32
    %132 = tpu.dynamic_rotate %92 by %c15_i32_63 dim 0 : vector<16x16xf32>, i32 -> vector<16x16xf32>
    %c1_i32_64 = arith.constant 1 : i32
    %133 = tpu.dynamic_rotate %132 by %c1_i32_64 dim 1 : vector<16x16xf32>, i32 -> vector<16x16xf32>
    %134 = arith.andi %5, %7 : vector<16x16xi1>
    %cst_65 = arith.constant 0.000000e+00 : f32
    %135 = vector.broadcast %cst_65 : f32 to vector<16x16xf32>
    %136 = arith.select %134, %133, %135 : vector<16x16xi1>, vector<16x16xf32>
    %137 = arith.cmpf ogt, %92, %136 : vector<16x16xf32>
    %138 = arith.andi %131, %137 : vector<16x16xi1>
    %139 = arith.andi %113, %138 : vector<16x16xi1>
    %140 = arith.ori %125, %139 : vector<16x16xi1>
    %c1_i32_66 = arith.constant 1 : i32
    %141 = tpu.dynamic_rotate %92 by %c1_i32_66 dim 0 : vector<16x16xf32>, i32 -> vector<16x16xf32>
    %cst_67 = arith.constant 0.000000e+00 : f32
    %142 = vector.broadcast %cst_67 : f32 to vector<16x16xf32>
    %143 = arith.select %3, %141, %142 : vector<16x16xi1>, vector<16x16xf32>
    %144 = arith.cmpf ogt, %92, %143 : vector<16x16xf32>
    %c15_i32_68 = arith.constant 15 : i32
    %145 = tpu.dynamic_rotate %92 by %c15_i32_68 dim 0 : vector<16x16xf32>, i32 -> vector<16x16xf32>
    %cst_69 = arith.constant 0.000000e+00 : f32
    %146 = vector.broadcast %cst_69 : f32 to vector<16x16xf32>
    %147 = arith.select %5, %145, %146 : vector<16x16xi1>, vector<16x16xf32>
    %148 = arith.cmpf ogt, %92, %147 : vector<16x16xf32>
    %149 = arith.andi %144, %148 : vector<16x16xi1>
    %150 = arith.andi %102, %149 : vector<16x16xi1>
    %151 = arith.ori %140, %150 : vector<16x16xi1>
    %c1_i32_70 = arith.constant 1 : i32
    %152 = tpu.dynamic_rotate %92 by %c1_i32_70 dim 0 : vector<16x16xf32>, i32 -> vector<16x16xf32>
    %c1_i32_71 = arith.constant 1 : i32
    %153 = tpu.dynamic_rotate %152 by %c1_i32_71 dim 1 : vector<16x16xf32>, i32 -> vector<16x16xf32>
    %154 = arith.andi %3, %7 : vector<16x16xi1>
    %cst_72 = arith.constant 0.000000e+00 : f32
    %155 = vector.broadcast %cst_72 : f32 to vector<16x16xf32>
    %156 = arith.select %154, %153, %155 : vector<16x16xi1>, vector<16x16xf32>
    %157 = arith.cmpf ogt, %92, %156 : vector<16x16xf32>
    %c15_i32_73 = arith.constant 15 : i32
    %158 = tpu.dynamic_rotate %92 by %c15_i32_73 dim 0 : vector<16x16xf32>, i32 -> vector<16x16xf32>
    %c15_i32_74 = arith.constant 15 : i32
    %159 = tpu.dynamic_rotate %158 by %c15_i32_74 dim 1 : vector<16x16xf32>, i32 -> vector<16x16xf32>
    %160 = arith.andi %5, %9 : vector<16x16xi1>
    %cst_75 = arith.constant 0.000000e+00 : f32
    %161 = vector.broadcast %cst_75 : f32 to vector<16x16xf32>
    %162 = arith.select %160, %159, %161 : vector<16x16xi1>, vector<16x16xf32>
    %163 = arith.cmpf ogt, %92, %162 : vector<16x16xf32>
    %164 = arith.andi %157, %163 : vector<16x16xi1>
    %165 = arith.andi %115, %164 : vector<16x16xi1>
    %166 = arith.ori %151, %165 : vector<16x16xi1>
    %cst_76 = arith.constant 0.000000e+00 : f32
    %167 = vector.broadcast %cst_76 : f32 to vector<16x16xf32>
    %168 = arith.select %166, %92, %167 : vector<16x16xi1>, vector<16x16xf32>
    %c0_77 = arith.constant 0 : index
    %c0_78 = arith.constant 0 : index
    %c0_79 = arith.constant 0 : index
    %c0_80 = arith.constant 0 : index
    %169 = vector.load %arg2[%c0_77, %c0_78, %c0_79, %c0_80] : memref<1x1x16x16xf32, #tpu.memory_space<vmem>>, vector<1x1x16x16xf32>
    %170 = vector.shape_cast %169 : vector<1x1x16x16xf32> to vector<16x16xf32>
    %171 = vector.shape_cast %168 : vector<16x16xf32> to vector<1x1x16x16xf32>
    tpu.vector_store %arg2[%c0_77, %c0_78, %c0_79, %c0_80], %171 {strides = array<i32>} : memref<1x1x16x16xf32, #tpu.memory_space<vmem>>, vector<1x1x16x16xf32>,
    return
  }
  func.func @transform_0(%arg0: i32) -> (i32, i32, i32, i32) {
    %c0_i32 = arith.constant 0 : i32
    %c0_i32_0 = arith.constant 0 : i32
    %c0_i32_1 = arith.constant 0 : i32
    %c0_i32_2 = arith.constant 0 : i32
    return %arg0, %c0_i32, %c0_i32_0, %c0_i32_1 : i32, i32, i32, i32
  }
  func.func @transform_1(%arg0: i32) -> (i32, i32, i32, i32) {
    %c0_i32 = arith.constant 0 : i32
    %c0_i32_0 = arith.constant 0 : i32
    %c0_i32_1 = arith.constant 0 : i32
    %c0_i32_2 = arith.constant 0 : i32
    return %arg0, %c0_i32, %c0_i32_0, %c0_i32_1 : i32, i32, i32, i32
  }
}

</mosaic_0001>

<llo_original>
// kernel: tpu_custom_call.1
$region0: #{tpu_custom_call.1}
  #allocation0 [shape = 'u32[]', space=smem, size = 0x4, offset = 0x4, fixed_abs, tag = 'smem constant byte address 0x4 - core index']
  #allocation1 [shape = 'u32[144,128]{1,0:T(1,128)}', space=vmem, size = 0x12000, scoped, tag = 'internal scratch']
  %s0 = inlined_call_operand.hbm [shape: f32[2,4,16,16], index: 0, kind: input, shape index: {}]
  %s1 = inlined_call_operand.hbm [shape: f32[2,1,16,16], index: 1, kind: output, shape index: {}]
  %s2 = sld [smem:[#allocation0]]
  $region41: #{tpu_custom_call.1} parent=0
    _
  %s4 = ssub.s32 1, %s2
  %s5 = scalar_select 0, %s4, %s2
  $region1: #{tpu_custom_call.1} parent=0
    #allocation2 [shape = 'u8[65536]{0}', space=vmem, size = 0x10000, scoped, tag = 'input window, operand 0']
    #allocation3 [shape = 's32[2]{0}', space=sflag, size = 0x8, scoped, tag = 'scoped memory for tpu_custom_call.1']
    #allocation4 [shape = 's32[2]{0}', space=sflag, size = 0x8, scoped, tag = 'scoped memory for tpu_custom_call.1']
    #allocation5 [shape = 'u8[16384]{0}', space=vmem, size = 0x4000, scoped, tag = 'output window, operand 0']
    %6 = vsyncpa [#allocation3], 0
    %s7 = scalar_lea.sflag [#allocation3], 1
    %8 = vsyncpa %s7, 0
    %9 = vsyncpa [#allocation4], 0
    %s10 = scalar_lea.sflag [#allocation4], 1
    %11 = vsyncpa %s10, 0
    loop: start=0, step=1, limit=4
    $region2: #{tpu_custom_call.1} parent=1 // loop_pre_header
      _
    $region3: #{tpu_custom_call.1} parent=1 // loop_header
      %s13 = sphi 0, %s17
      %p14 = scmp.ge.s32.totalorder %s13, 4
      %s23 = sphi 0, %s25
      %s26 = sphi 0, %s23
      %s27 = sphi 0, %s26
      %s43 = sphi 0, %s27
      %s49 = sphi 0, %s51
      %s52 = sphi 0, %s49
      %s53 = sphi 0, %s52
      %s69 = sphi 0, %s53
    $region4: #{tpu_custom_call.1} parent=1 // loop_header_branch
      %16 = sbr.rel (%p14) target = $region8
    $region5: #{tpu_custom_call.1} parent=1 // loop_body
      %s18 = ssub.s32 %s13, 1
      %s19 = ssub.s32 %s13, 2
      %s20 = sadd.s32 %s13, 1
      %s21 = ssub.s32 %s13, %s20
      %p22 = scmp.eq.s32.totalorder %s21, 0
      %s24 = sadd.s32 %s23, 1
      %s25 = scalar_select %p22, %s23, %s24
      %p28 = pneg %p22
      %p29 = scmp.eq.s32.totalorder %s13, 1
      %p30 = por %p28, %p29
      %p31 = scmp.ne.s32.totalorder %s23, %s26
      %p32 = scmp.eq.s32.totalorder %s13, 0
      %p33 = por %p31, %p32
      %p34 = scmp.ne.s32.totalorder %s23, %s26
      %p35 = scmp.eq.s32.totalorder %s18, 1
      %p36 = por %p34, %p35
      %p37 = scmp.ne.s32.totalorder %s26, %s27
      %p38 = scmp.eq.s32.totalorder %s18, 0
      %p39 = por %p37, %p38
      %p40 = scmp.ne.s32.totalorder %s26, %s27
      %p41 = scmp.eq.s32.totalorder %s19, 1
      %p42 = por %p40, %p41
      %p44 = scmp.ne.s32.totalorder %s27, %s43
      %p45 = scmp.eq.s32.totalorder %s19, 0
      %p46 = por %p44, %p45
      %s47 = ssub.s32 %s13, %s20
      %p48 = scmp.eq.s32.totalorder %s47, 0
      %s50 = sadd.s32 %s49, 1
      %s51 = scalar_select %p48, %s49, %s50
      %p54 = pneg %p48
      %p55 = scmp.eq.s32.totalorder %s13, 1
      %p56 = por %p54, %p55
      %p57 = scmp.ne.s32.totalorder %s49, %s52
      %p58 = scmp.eq.s32.totalorder %s13, 0
      %p59 = por %p57, %p58
      %p60 = scmp.ne.s32.totalorder %s49, %s52
      %p61 = scmp.eq.s32.totalorder %s18, 1
      %p62 = por %p60, %p61
      %p63 = scmp.ne.s32.totalorder %s52, %s53
      %p64 = scmp.eq.s32.totalorder %s18, 0
      %p65 = por %p63, %p64
      %p66 = scmp.ne.s32.totalorder %s52, %s53
      %p67 = scmp.eq.s32.totalorder %s19, 1
      %p68 = por %p66, %p67
      %p70 = scmp.ne.s32.totalorder %s53, %s69
      %p71 = scmp.eq.s32.totalorder %s19, 0
      %p72 = por %p70, %p71
      %p73 = scmp.le.s32.totalorder 1, %s13
      %p74 = scmp.lt.s32.totalorder %s13, 3
      %p75 = pnand %p73, %p74
      %p76 = pneg %p75
      // Predicated region
      $region9: #{tpu_custom_call.1} parent=5 // pred_check
        _
      $region10: #{tpu_custom_call.1} parent=5 // pred_check_branch
        %78 = sbr.rel (%p75) target = $region12
      $region11: #{tpu_custom_call.1} parent=5 // pred_region
        %s79 = ssub.s32 %s13, 1
      $region12: #{tpu_custom_call.1} parent=5 // pred_fallthru
        _
      %p80 = scmp.lt.s32.totalorder %s13, 2
      // Predicated region
      $region13: #{tpu_custom_call.1} parent=5 // pred_check
        %p81 = pneg %p80
      $region14: #{tpu_custom_call.1} parent=5 // pred_check_branch
        %83 = sbr.rel (%p81) target = $region16
      $region15: #{tpu_custom_call.1} parent=5 // pred_region
        // Predicated region
        $region17: #{tpu_custom_call.1} parent=15 // pred_check
          %p84 = pneg %p33
        $region18: #{tpu_custom_call.1} parent=15 // pred_check_branch
          %86 = sbr.rel (%p84) target = $region20
        $region19: #{tpu_custom_call.1} parent=15 // pred_region
          %s87 = sand.u32 %s23, 1
          %s88 = scalar_lea.sflag [#allocation3], %s87
          %s89 = sand.u32 %s23, 1
          %s90 = smul.addr %s89, 64
          %s91 = scalar_lea.vmem [#allocation2], %s90
          %s93 = ssub.s32 1024, 1024
          %94 = vsyncadd %s88, %s93
          %s95 = smul.addr %s13, 8
          %s96 = smul.addr %s95, 128
          %s97 = scalar_lea.hbm %s0, %s96
          %s98 = sshll.u32 %s91, 4
          %s99 = int_to_ptr.vmem [resolvable:$true] %s98
          %104 = dma.hbm_to_vmem [thread:$0]  %s97, 1024, %s99, %s88, 128, 128, 8
        $region20: #{tpu_custom_call.1} parent=15 // pred_fallthru
          _
      $region16: #{tpu_custom_call.1} parent=5 // pred_fallthru
        _
      %p105 = scmp.le.s32.totalorder 1, %s13
      %p106 = scmp.lt.s32.totalorder %s13, 3
      %p107 = pnand %p105, %p106
      %p108 = pneg %p107
      // Predicated region
      $region21: #{tpu_custom_call.1} parent=5 // pred_check
        _
      $region22: #{tpu_custom_call.1} parent=5 // pred_check_branch
        %110 = sbr.rel (%p107) target = $region24
      $region23: #{tpu_custom_call.1} parent=5 // pred_region
        %s111 = ssub.s32 %s13, 1
        %s112 = sand.u32 %s26, 1
        %s113 = scalar_lea.sflag [#allocation3], %s112
        %s114 = sand.u32 %s26, 1
        %s115 = smul.addr %s114, 64
        %s116 = scalar_lea.vmem [#allocation2], %s115
        // Predicated region
        $region25: #{tpu_custom_call.1} parent=23 // pred_check
          %p117 = pneg %p39
        $region26: #{tpu_custom_call.1} parent=23 // pred_check_branch
          %119 = sbr.rel (%p117) target = $region28
        $region27: #{tpu_custom_call.1} parent=23 // pred_region
          %120 = dma.done %s113, 1024
        $region28: #{tpu_custom_call.1} parent=23 // pred_fallthru
          _
        %s121 = sand.u32 %s26, 1
        %s122 = scalar_lea.sflag [#allocation3], %s121
        %s123 = sand.u32 %s26, 1
        %s124 = smul.addr %s123, 64
        %s125 = scalar_lea.vmem [#allocation2], %s124
        %p126 = pneg %p39
        %p127 = pneg %p36
        %p128 = pneg %p65
        %p129 = pneg %p62
        %s130 = sand.u32 %s52, 1
        %s131 = scalar_lea.sflag [#allocation4], %s130
        %s132 = sand.u32 %s52, 1
        %s133 = smul.addr %s132, 16
        %s134 = scalar_lea.vmem [#allocation5], %s133
        %v135 = vlaneseq
        %v136 = vshrl.u32 %v135, 7
        %v137 = vadd.s32 %v136, 8
        %v138 = vlaneseq
        %v139 = vand.u32 %v138, 127
        %vm140 = vcmp.ge.s32.totalorder %v136, 1
        %vm141 = vcmp.ge.s32.totalorder %v137, 1
        %vm142 = vcmp.lt.s32.totalorder %v136, 15
        %vm143 = vcmp.lt.s32.totalorder %v137, 15
        %vm144 = vcmp.ge.s32.totalorder %v139, 1
        %vm145 = vcmp.lt.s32.totalorder %v139, 15
        %v146 = vld [vmem:[%s116] sm:$0xff]
        %v147 = vld [vmem:[%s116 + $0x8] sm:$0xff]
        %s148 = scalar_lea.vmem %s116, 16 [#allocation2]
        %v149 = vld [vmem:[%s148] sm:$0xff]
        %v150 = vld [vmem:[%s148 + $0x8] sm:$0xff]
        %v151 = vadd.f32 %v146, %v149
        %v152 = vadd.f32 %v147, %v150
        %s153 = scalar_lea.vmem %s116, 32 [#allocation2]
        %v154 = vld [vmem:[%s153] sm:$0xff]
        %v155 = vld [vmem:[%s153 + $0x8] sm:$0xff]
        %v156 = vadd.f32 %v151, %v154
        %v157 = vadd.f32 %v152, %v155
        %s158 = scalar_lea.vmem %s116, 48 [#allocation2]
        %v159 = vld [vmem:[%s158] sm:$0xff]
        %v160 = vld [vmem:[%s158 + $0x8] sm:$0xff]
        %v161 = vadd.f32 %v156, %v159
        %v162 = vadd.f32 %v157, %v160
        %v163 = vmul.f32 %v161, 63.75
        %v164 = vmul.f32 %v162, 63.75
        %v165 = vrot.slane %v163, 7
        %v166 = vrot.slane %v164, 7
        %vm167 = vcmp.lt.s32.totalorder %v136, 1
        %v168 = vsel %vm167, %v165, %v166
        %v169 = vsel %vm167, %v166, %v165
        %v170 = vsel %vm140, %v169, 0.0
        %v171 = vsel %vm141, %v168, 0.0
        %v172 = vmul.f32 %v170, 0.27406862
        %v173 = vmul.f32 %v171, 0.27406862
        %v174 = vmul.f32 %v163, 0.45186275
        %v175 = vmul.f32 %v164, 0.45186275
        %v176 = vadd.f32 %v172, %v174
        %v177 = vadd.f32 %v173, %v175
        %v178 = vrot.slane %v163, 1
        %v179 = vrot.slane %v164, 1
        %vm180 = vcmp.lt.s32.totalorder %v136, 7
        %v181 = vsel %vm180, %v178, %v179
        %v182 = vsel %vm180, %v179, %v178
        %v183 = vsel %vm142, %v181, 0.0
        %v184 = vsel %vm143, %v182, 0.0
        %v185 = vmul.f32 %v183, 0.27406862
        %v186 = vmul.f32 %v184, 0.27406862
        %v187 = vadd.f32 %v176, %v185
        %v188 = vadd.f32 %v177, %v186
        %vm189 = vcmask 1047680
        %190 = vrot.lane.b32.xlu0 %v187, 16
        %v191 = vpop.permute.xlu0 %190
        %v192 = vsel %vm189, %v191, %v187
        %193 = vrot.lane.b32.xlu0 %v188, 16
        %v194 = vpop.permute.xlu0 %193
        %v195 = vsel %vm189, %v194, %v188
        %196 = vrot.lane.b32.xlu0 %v192, 16
        %v197 = vpop.permute.xlu0 %196
        %198 = vrot.lane.b32.xlu0 %v195, 16
        %v199 = vpop.permute.xlu0 %198
        %v200 = vsel %vm189, %v197, %v187
        %v201 = vsel %vm189, %v199, %v188
        %204 = vrot.lane.b32.xlu0 %v200, 113
        %v205 = vpop.permute.xlu0 %204
        %206 = vrot.lane.b32.xlu0 %v201, 113
        %v207 = vpop.permute.xlu0 %206
        %v210 = vsel %vm144, %v205, 0.0
        %v211 = vsel %vm144, %v207, 0.0
        %v212 = vmul.f32 %v210, 0.27406862
        %v213 = vmul.f32 %v211, 0.27406862
        %v214 = vmul.f32 %v187, 0.45186275
        %v215 = vmul.f32 %v188, 0.45186275
        %v216 = vadd.f32 %v212, %v214
        %v217 = vadd.f32 %v213, %v215
        %218 = vrot.lane.b32.xlu0 %v200, 127
        %v219 = vpop.permute.xlu0 %218
        %220 = vrot.lane.b32.xlu0 %v201, 127
        %v221 = vpop.permute.xlu0 %220
        %v224 = vsel %vm145, %v219, 0.0
        %v225 = vsel %vm145, %v221, 0.0
        %v226 = vmul.f32 %v224, 0.27406862
        %v227 = vmul.f32 %v225, 0.27406862
        %v228 = vadd.f32 %v216, %v226
        %v229 = vadd.f32 %v217, %v227
        %v230 = vrot.slane %v228, 7
        %v231 = vrot.slane %v229, 7
        %v232 = vsel %vm167, %v230, %v231
        %v233 = vsel %vm167, %v231, %v230
        %v234 = vsel %vm140, %v233, 0.0
        %v235 = vsel %vm141, %v232, 0.0
        %v236 = vmul.f32 %v234, 0.5
        %v237 = vmul.f32 %v235, 0.5
        %v238 = vadd.f32 %v236, %v228
        %v239 = vadd.f32 %v237, %v229
        %v240 = vrot.slane %v228, 1
        %v241 = vrot.slane %v229, 1
        %v242 = vsel %vm180, %v240, %v241
        %v243 = vsel %vm180, %v241, %v240
        %v244 = vsel %vm142, %v242, 0.0
        %v245 = vsel %vm143, %v243, 0.0
        %v246 = vmul.f32 %v244, 0.5
        %v247 = vmul.f32 %v245, 0.5
        %v248 = vadd.f32 %v238, %v246
        %v249 = vadd.f32 %v239, %v247
        %250 = vrot.lane.b32.xlu0 %v248, 16
        %v251 = vpop.permute.xlu0 %250
        %v252 = vsel %vm189, %v251, %v248
        %253 = vrot.lane.b32.xlu0 %v249, 16
        %v254 = vpop.permute.xlu0 %253
        %v255 = vsel %vm189, %v254, %v249
        %256 = vrot.lane.b32.xlu0 %v252, 16
        %v257 = vpop.permute.xlu0 %256
        %258 = vrot.lane.b32.xlu0 %v255, 16
        %v259 = vpop.permute.xlu0 %258
        %v260 = vsel %vm189, %v257, %v248
        %v261 = vsel %vm189, %v259, %v249
        %264 = vrot.lane.b32.xlu0 %v260, 127
        %v265 = vpop.permute.xlu0 %264
        %266 = vrot.lane.b32.xlu0 %v261, 127
        %v267 = vpop.permute.xlu0 %266
        %v270 = vsel %vm145, %v265, 0.0
        %v271 = vsel %vm145, %v267, 0.0
        %272 = vrot.lane.b32.xlu0 %v260, 113
        %v273 = vpop.permute.xlu0 %272
        %274 = vrot.lane.b32.xlu0 %v261, 113
        %v275 = vpop.permute.xlu0 %274
        %v278 = vsel %vm144, %v273, 0.0
        %v279 = vsel %vm144, %v275, 0.0
        %v280 = vsub.f32 %v270, %v278
        %v281 = vsub.f32 %v271, %v279
        %282 = vrot.lane.b32.xlu0 %v228, 16
        %v283 = vpop.permute.xlu0 %282
        %v284 = vsel %vm189, %v283, %v228
        %285 = vrot.lane.b32.xlu0 %v229, 16
        %v286 = vpop.permute.xlu0 %285
        %v287 = vsel %vm189, %v286, %v229
        %288 = vrot.lane.b32.xlu0 %v284, 16
        %v289 = vpop.permute.xlu0 %288
        %290 = vrot.lane.b32.xlu0 %v287, 16
        %v291 = vpop.permute.xlu0 %290
        %v292 = vsel %vm189, %v289, %v228
        %v293 = vsel %vm189, %v291, %v229
        %296 = vrot.lane.b32.xlu0 %v292, 113
        %v297 = vpop.permute.xlu0 %296
        %298 = vrot.lane.b32.xlu0 %v293, 113
        %v299 = vpop.permute.xlu0 %298
        %v302 = vsel %vm144, %v297, 0.0
        %v303 = vsel %vm144, %v299, 0.0
        %v304 = vmul.f32 %v302, 0.5
        %v305 = vmul.f32 %v303, 0.5
        %v306 = vadd.f32 %v304, %v228
        %v307 = vadd.f32 %v305, %v229
        %308 = vrot.lane.b32.xlu0 %v292, 127
        %v309 = vpop.permute.xlu0 %308
        %310 = vrot.lane.b32.xlu0 %v293, 127
        %v311 = vpop.permute.xlu0 %310
        %v314 = vsel %vm145, %v309, 0.0
        %v315 = vsel %vm145, %v311, 0.0
        %v316 = vmul.f32 %v314, 0.5
        %v317 = vmul.f32 %v315, 0.5
        %v318 = vadd.f32 %v306, %v316
        %v319 = vadd.f32 %v307, %v317
        %v320 = vrot.slane %v318, 1
        %v321 = vrot.slane %v319, 1
        %v322 = vsel %vm180, %v320, %v321
        %v323 = vsel %vm180, %v321, %v320
        %v324 = vsel %vm142, %v322, 0.0
        %v325 = vsel %vm143, %v323, 0.0
        %v326 = vrot.slane %v318, 7
        %v327 = vrot.slane %v319, 7
        %v328 = vsel %vm167, %v326, %v327
        %v329 = vsel %vm167, %v327, %v326
        %v330 = vsel %vm140, %v329, 0.0
        %v331 = vsel %vm141, %v328, 0.0
        %v332 = vsub.f32 %v324, %v330
        %v333 = vsub.f32 %v325, %v331
        %v334 = vmul.f32 %v280, %v280
        %v335 = vmul.f32 %v281, %v281
        %v336 = vmul.f32 %v332, %v332
        %v337 = vmul.f32 %v333, %v333
        %v338 = vadd.f32 %v334, %v336
        %v339 = vadd.f32 %v335, %v337
        %v340 = vrsqrt.pop %v338
        %v341 = vmul.f32 %v338, %v340
        %vm342 = vcmp.eq.f32.partialorder %v338, inf
        %v343 = vsel %vm342, %v338, %v341
        %vm344 = vcmp.eq.f32.partialorder %v338, 0.0
        %v345 = vand.u32 %v338, 2147483648
        %v346 = vsel %vm344, %v345, %v343
        %v347 = vrsqrt.pop %v339
        %v348 = vmul.f32 %v339, %v347
        %vm349 = vcmp.eq.f32.partialorder %v339, inf
        %v350 = vsel %vm349, %v339, %v348
        %vm351 = vcmp.eq.f32.partialorder %v339, 0.0
        %v352 = vand.u32 %v339, 2147483648
        %v353 = vsel %vm351, %v352, %v350
        %v354 = vand.u32 2147483647, %v280
        %v355 = vand.u32 2147483647, %v281
        %v356 = vand.u32 2147483647, %v332
        %v357 = vand.u32 2147483647, %v333
        %v358 = vmul.f32 %v354, 0.41421357
        %v359 = vmul.f32 %v355, 0.41421357
        %vm360 = vcmp.le.f32.partialorder %v356, %v358
        %vm361 = vcmp.le.f32.partialorder %v357, %v359
        %vm362 = vmxor %vm360, 1
        %vm363 = vmxor %vm361, 1
        %v364 = vmul.f32 %v356, 0.41421357
        %v365 = vmul.f32 %v357, 0.41421357
        %vm366 = vcmp.le.f32.partialorder %v354, %v364
        %vm367 = vcmp.le.f32.partialorder %v355, %v365
        %vm368 = vmand %vm362, %vm366
        %vm369 = vmand %vm363, %vm367
        %vm370 = vcmp.gt.f32.partialorder %v354, %v364
        %vm371 = vcmp.gt.f32.partialorder %v355, %v365
        %vm372 = vmand %vm362, %vm370
        %vm373 = vmand %vm363, %vm371
        %vm374 = vcmp.gt.f32.partialorder %v280, 0.0
        %vm375 = vcmp.gt.f32.partialorder %v281, 0.0
        %vm376 = vcmp.gt.f32.partialorder %v332, 0.0
        %vm377 = vcmp.gt.f32.partialorder %v333, 0.0
        %vm378 = vmxor %vm374, %vm376
        %vm379 = vmxor %vm375, %vm377
        %vm380 = vmxor %vm378, 1
        %vm381 = vmxor %vm379, 1
        %vm382 = vmand %vm372, %vm380
        %vm383 = vmand %vm373, %vm381
        %vm384 = vmand %vm372, %vm378
        %vm385 = vmand %vm373, %vm379
        %386 = vrot.lane.b32.xlu0 %v346, 16
        %v387 = vpop.permute.xlu0 %386
        %v388 = vsel %vm189, %v387, %v346
        %389 = vrot.lane.b32.xlu0 %v353, 16
        %v390 = vpop.permute.xlu0 %389
        %v391 = vsel %vm189, %v390, %v353
        %392 = vrot.lane.b32.xlu0 %v388, 16
        %v393 = vpop.permute.xlu0 %392
        %394 = vrot.lane.b32.xlu0 %v391, 16
        %v395 = vpop.permute.xlu0 %394
        %v396 = vsel %vm189, %v393, %v346
        %v397 = vsel %vm189, %v395, %v353
        %400 = vrot.lane.b32.xlu0 %v396, 127
        %v401 = vpop.permute.xlu0 %400
        %402 = vrot.lane.b32.xlu0 %v397, 127
        %v403 = vpop.permute.xlu0 %402
        %v406 = vsel %vm145, %v401, 0.0
        %v407 = vsel %vm145, %v403, 0.0
        %vm408 = vcmp.gt.f32.partialorder %v346, %v406
        %vm409 = vcmp.gt.f32.partialorder %v353, %v407
        %410 = vrot.lane.b32.xlu0 %v396, 113
        %v411 = vpop.permute.xlu0 %410
        %412 = vrot.lane.b32.xlu0 %v397, 113
        %v413 = vpop.permute.xlu0 %412
        %v416 = vsel %vm144, %v411, 0.0
        %v417 = vsel %vm144, %v413, 0.0
        %vm418 = vcmp.gt.f32.partialorder %v346, %v416
        %vm419 = vcmp.gt.f32.partialorder %v353, %v417
        %vm420 = vmand %vm408, %vm418
        %vm421 = vmand %vm409, %vm419
        %vm422 = vmand %vm360, %vm420
        %vm423 = vmand %vm361, %vm421
        %v424 = vrot.slane %v346, 7
        %v425 = vrot.slane %v353, 7
        %v426 = vsel %vm167, %v424, %v425
        %v427 = vsel %vm167, %v425, %v424
        %428 = vrot.lane.b32.xlu0 %v427, 16
        %v429 = vpop.permute.xlu0 %428
        %v430 = vsel %vm189, %v429, %v427
        %431 = vrot.lane.b32.xlu0 %v426, 16
        %v432 = vpop.permute.xlu0 %431
        %v433 = vsel %vm189, %v432, %v426
        %434 = vrot.lane.b32.xlu0 %v430, 16
        %v435 = vpop.permute.xlu0 %434
        %436 = vrot.lane.b32.xlu0 %v433, 16
        %v437 = vpop.permute.xlu0 %436
        %v438 = vsel %vm189, %v435, %v427
        %v439 = vsel %vm189, %v437, %v426
        %vm440 = vmand %vm140, %vm145
        %vm441 = vmand %vm141, %vm145
        %444 = vrot.lane.b32.xlu0 %v438, 127
        %v445 = vpop.permute.xlu0 %444
        %446 = vrot.lane.b32.xlu0 %v439, 127
        %v447 = vpop.permute.xlu0 %446
        %v450 = vsel %vm440, %v445, 0.0
        %v451 = vsel %vm441, %v447, 0.0
        %vm452 = vcmp.gt.f32.partialorder %v346, %v450
        %vm453 = vcmp.gt.f32.partialorder %v353, %v451
        %v454 = vrot.slane %v346, 1
        %v455 = vrot.slane %v353, 1
        %v456 = vsel %vm180, %v454, %v455
        %v457 = vsel %vm180, %v455, %v454
        %458 = vrot.lane.b32.xlu0 %v456, 16
        %v459 = vpop.permute.xlu0 %458
        %v460 = vsel %vm189, %v459, %v456
        %461 = vrot.lane.b32.xlu0 %v457, 16
        %v462 = vpop.permute.xlu0 %461
        %v463 = vsel %vm189, %v462, %v457
        %464 = vrot.lane.b32.xlu0 %v460, 16
        %v465 = vpop.permute.xlu0 %464
        %466 = vrot.lane.b32.xlu0 %v463, 16
        %v467 = vpop.permute.xlu0 %466
        %v468 = vsel %vm189, %v465, %v456
        %v469 = vsel %vm189, %v467, %v457
        %vm470 = vmand %vm142, %vm144
        %vm471 = vmand %vm143, %vm144
        %474 = vrot.lane.b32.xlu0 %v468, 113
        %v475 = vpop.permute.xlu0 %474
        %476 = vrot.lane.b32.xlu0 %v469, 113
        %v477 = vpop.permute.xlu0 %476
        %v480 = vsel %vm470, %v475, 0.0
        %v481 = vsel %vm471, %v477, 0.0
        %vm482 = vcmp.gt.f32.partialorder %v346, %v480
        %vm483 = vcmp.gt.f32.partialorder %v353, %v481
        %vm484 = vmand %vm452, %vm482
        %vm485 = vmand %vm453, %vm483
        %vm486 = vmand %vm382, %vm484
        %vm487 = vmand %vm383, %vm485
        %vm488 = vmor %vm422, %vm486
        %vm489 = vmor %vm423, %vm487
        %v490 = vsel %vm140, %v427, 0.0
        %v491 = vsel %vm141, %v426, 0.0
        %vm492 = vcmp.gt.f32.partialorder %v346, %v490
        %vm493 = vcmp.gt.f32.partialorder %v353, %v491
        %v494 = vsel %vm142, %v456, 0.0
        %v495 = vsel %vm143, %v457, 0.0
        %vm496 = vcmp.gt.f32.partialorder %v346, %v494
        %vm497 = vcmp.gt.f32.partialorder %v353, %v495
        %vm498 = vmand %vm492, %vm496
        %vm499 = vmand %vm493, %vm497
        %vm500 = vmand %vm368, %vm498
        %vm501 = vmand %vm369, %vm499
        %vm502 = vmor %vm488, %vm500
        %vm503 = vmor %vm489, %vm501
        %vm504 = vmand %vm140, %vm144
        %vm505 = vmand %vm141, %vm144
        %506 = vrot.lane.b32.xlu0 %v438, 113
        %v507 = vpop.permute.xlu0 %506
        %508 = vrot.lane.b32.xlu0 %v439, 113
        %v509 = vpop.permute.xlu0 %508
        %v512 = vsel %vm504, %v507, 0.0
        %v513 = vsel %vm505, %v509, 0.0
        %vm514 = vcmp.gt.f32.partialorder %v346, %v512
        %vm515 = vcmp.gt.f32.partialorder %v353, %v513
        %vm516 = vmand %vm142, %vm145
        %vm517 = vmand %vm143, %vm145
        %518 = vrot.lane.b32.xlu0 %v468, 127
        %v519 = vpop.permute.xlu0 %518
        %520 = vrot.lane.b32.xlu0 %v469, 127
        %v521 = vpop.permute.xlu0 %520
        %v524 = vsel %vm516, %v519, 0.0
        %v525 = vsel %vm517, %v521, 0.0
        %vm526 = vcmp.gt.f32.partialorder %v346, %v524
        %vm527 = vcmp.gt.f32.partialorder %v353, %v525
        %vm528 = vmand %vm514, %vm526
        %vm529 = vmand %vm515, %vm527
        %vm530 = vmand %vm384, %vm528
        %vm531 = vmand %vm385, %vm529
        %vm532 = vmor %vm502, %vm530
        %vm533 = vmor %vm503, %vm531
        %v534 = vsel %vm532, %v346, 0.0
        %v535 = vsel %vm533, %v353, 0.0
        %vm536 = vcmask 130048
        %537 = vst.msk [vmem:[%s134] sm:$0xff] %vm536, %v534
        %538 = vst.msk [vmem:[%s134 + $0x8] sm:$0xff] %vm536, %v535
        %s539 = sand.u32 %s52, 1
        %s540 = scalar_lea.sflag [#allocation4], %s539
        %s541 = sand.u32 %s52, 1
        %s542 = smul.addr %s541, 16
        %s543 = scalar_lea.vmem [#allocation5], %s542
        // Predicated region
        $region29: #{tpu_custom_call.1} parent=23 // pred_check
          %p544 = pneg %p62
        $region30: #{tpu_custom_call.1} parent=23 // pred_check_branch
          %546 = sbr.rel (%p544) target = $region32
        $region31: #{tpu_custom_call.1} parent=23 // pred_region
          %s548 = ssub.s32 256, 256
          %549 = vsyncadd %s540, %s548
          %s550 = smul.addr %s18, 2
          %s551 = smul.addr %s550, 128
          %s552 = scalar_lea.hbm %s1, %s551
          %s553 = sshll.u32 %s543, 4
          %s554 = int_to_ptr.vmem [resolvable:$true] %s553
          %559 = dma.vmem_to_hbm [thread:$0]  %s554, 256, %s552, %s540, 128, 128, 8
        $region32: #{tpu_custom_call.1} parent=23 // pred_fallthru
          _
      $region24: #{tpu_custom_call.1} parent=5 // pred_fallthru
        _
      %p560 = scmp.le.s32.totalorder 2, %s13
      // Predicated region
      $region33: #{tpu_custom_call.1} parent=5 // pred_check
        %p561 = pneg %p560
      $region34: #{tpu_custom_call.1} parent=5 // pred_check_branch
        %563 = sbr.rel (%p561) target = $region36
      $region35: #{tpu_custom_call.1} parent=5 // pred_region
        %s564 = ssub.s32 %s13, 2
        // Predicated region
        $region37: #{tpu_custom_call.1} parent=35 // pred_check
          %p565 = pneg %p68
        $region38: #{tpu_custom_call.1} parent=35 // pred_check_branch
          %567 = sbr.rel (%p565) target = $region40
        $region39: #{tpu_custom_call.1} parent=35 // pred_region
          %s568 = sand.u32 %s53, 1
          %s569 = scalar_lea.sflag [#allocation4], %s568
          %s570 = sand.u32 %s53, 1
          %s571 = smul.addr %s570, 16
          %s572 = scalar_lea.vmem [#allocation5], %s571
          %573 = dma.done %s569, 256
        $region40: #{tpu_custom_call.1} parent=35 // pred_fallthru
          _
      $region36: #{tpu_custom_call.1} parent=5 // pred_fallthru
        _
    $region6: #{tpu_custom_call.1} parent=1 // loop_footer
      %s17 = sadd.s32 1, %s13
    $region7: #{tpu_custom_call.1} parent=1 // loop_footer_branch
      %12 = sbr.rel target = $region3
    $region8: #{tpu_custom_call.1} parent=1 // loop_exit
      _
    %574 = vsyncpa [#allocation3], 1
    %s575 = scalar_lea.sflag [#allocation3], 1
    %576 = vsyncpa %s575, 1
    %577 = vsyncpa [#allocation4], 1
    %s578 = scalar_lea.sflag [#allocation4], 1
    %579 = vsyncpa %s578, 1

</llo_original>
